<compile_context>
chip_gen: v6e
topology: v6e:2x2x1
jax: 0.10.0
libtpu: 0.0.40
codegen_flags: <defaults>
</compile_context>

<pallas_src>
import math
import functools

import jax
import jax.numpy as jnp
from jax.experimental import pallas as pl
from jax.experimental.pallas import tpu as pltpu

VMEM_LIMIT = 32 * 1024 * 1024  # scoped-VMEM budget; safe on v5e/v6e/v7x
NEG_INF = -1e30


def _pick_tile(dim, candidates):
    """Largest candidate tile evenly dividing dim, else the full dim (always legal)."""
    for c in candidates:
        if dim % c == 0:
            return c
    return dim


# ----------------------------- tiled linear kernel --------------------------

def _matmul_kernel(x_ref, w_ref, b_ref, o_ref, acc_ref, *, activation):
    @pl.when(pl.program_id(2) == 0)
    def _():
        acc_ref[...] = jnp.zeros_like(acc_ref)

    acc_ref[...] += jnp.dot(x_ref[...], w_ref[...],
                            preferred_element_type=jnp.float32)

    @pl.when(pl.program_id(2) == pl.num_programs(2) - 1)
    def _():
        y = acc_ref[...] + b_ref[...]
        if activation == "relu":
            y = jnp.maximum(y, 0.0)
        o_ref[...] = y.astype(o_ref.dtype)


def linear(x2d, w, b, activation=None, out_dtype=jnp.bfloat16):
    """x2d: (M, K) bf16, w: (K, N) bf16 (pre-transposed), b: (N,) f32 -> (M, N)."""
    M, K = x2d.shape
    N = w.shape[1]
    tm = _pick_tile(M, (512, 256, 128))
    tn = _pick_tile(N, (1024, 512, 256, 128))
    tk = _pick_tile(K, (512, 256, 128))
    b2 = b.reshape(1, N).astype(jnp.float32)
    return pl.pallas_call(
        functools.partial(_matmul_kernel, activation=activation),
        out_shape=jax.ShapeDtypeStruct((M, N), out_dtype),
        grid=(M // tm, N // tn, K // tk),
        in_specs=[
            pl.BlockSpec((tm, tk), lambda i, j, k: (i, k)),
            pl.BlockSpec((tk, tn), lambda i, j, k: (k, j)),
            pl.BlockSpec((1, tn), lambda i, j, k: (0, j)),
        ],
        out_specs=pl.BlockSpec((tm, tn), lambda i, j, k: (i, j)),
        scratch_shapes=[pltpu.VMEM((tm, tn), jnp.float32)],
        compiler_params=pltpu.CompilerParams(
            dimension_semantics=("parallel", "parallel", "arbitrary"),
            vmem_limit_bytes=VMEM_LIMIT),
    )(x2d.astype(jnp.bfloat16), w, b2)


# ----------------------- fused residual + LayerNorm --------------------------

def _ln_kernel(*refs, has_residual):
    if has_residual:
        x_ref, r_ref, g_ref, b_ref, o_ref = refs
        x = x_ref[...].astype(jnp.float32) + r_ref[...].astype(jnp.float32)
    else:
        x_ref, g_ref, b_ref, o_ref = refs
        x = x_ref[...].astype(jnp.float32)
    # single-pass mean / variance (E[x^2] - E[x]^2)
    mu = jnp.mean(x, axis=-1, keepdims=True)
    mu2 = jnp.mean(x * x, axis=-1, keepdims=True)
    inv = jax.lax.rsqrt(mu2 - mu * mu + 1e-5)
    o_ref[...] = ((x - mu) * inv * g_ref[...] + b_ref[...]).astype(o_ref.dtype)


def _ln_call(x2, r2, g, b):
    M, H = x2.shape
    tm = _pick_tile(M, (512, 256, 128))
    g2 = g.reshape(1, H).astype(jnp.float32)
    b2 = b.reshape(1, H).astype(jnp.float32)
    has_res = r2 is not None

    row_spec = pl.BlockSpec((tm, H), lambda i: (i, 0))
    vec_spec = pl.BlockSpec((1, H), lambda i: (0, 0))
    in_specs = [row_spec] + ([row_spec] if has_res else []) + [vec_spec, vec_spec]
    operands = [x2] + ([r2] if has_res else []) + [g2, b2]

    return pl.pallas_call(
        functools.partial(_ln_kernel, has_residual=has_res),
        out_shape=jax.ShapeDtypeStruct((M, H), jnp.bfloat16),
        grid=(M // tm,),
        in_specs=in_specs,
        out_specs=pl.BlockSpec((tm, H), lambda i: (i, 0)),
        compiler_params=pltpu.CompilerParams(
            dimension_semantics=("parallel",),
            vmem_limit_bytes=VMEM_LIMIT),
    )(*operands)


def layer_norm(x, g, b):
    shp = x.shape
    H = shp[-1]
    return _ln_call(x.reshape(-1, H).astype(jnp.bfloat16), None, g, b).reshape(shp)


def add_layer_norm(x, r, g, b):
    """LayerNorm(x + r) with the residual add fused inside the kernel."""
    shp = x.shape
    H = shp[-1]
    return _ln_call(x.reshape(-1, H).astype(jnp.bfloat16),
                    r.reshape(-1, H).astype(jnp.bfloat16), g, b).reshape(shp)


# --------------------------- flash-style attention ---------------------------

def _flash_attn_kernel(*args, scale, nhead, has_am, has_kpm):
    q_ref, k_ref, v_ref = args[:3]
    pos = 3
    am_ref = args[pos] if has_am else None
    pos += 1 if has_am else 0
    kpm_ref = args[pos] if has_kpm else None
    pos += 1 if has_kpm else 0
    o_ref = args[pos]
    m_sc, l_sc, acc_sc = args[pos + 1], args[pos + 2], args[pos + 3]

    @pl.when(pl.program_id(2) == 0)
    def _():
        m_sc[...] = jnp.full_like(m_sc, NEG_INF)
        l_sc[...] = jnp.zeros_like(l_sc)
        acc_sc[...] = jnp.zeros_like(acc_sc)

    # additive bias shared by all heads of this (batch, q-block, k-block) step
    bias = None
    if has_am:
        bias = am_ref[...]                       # (tq, tk) f32
    if has_kpm:
        kb = kpm_ref[0]                          # (1, tk) f32 -> broadcast over tq
        bias = kb if bias is None else bias + kb

    for h in range(nhead):                       # all heads in one grid step
        q = q_ref[:, 0, 0, h, :]                 # (tq, dh) bf16
        k = k_ref[:, 0, 0, h, :]                 # (tk, dh) bf16
        v = v_ref[:, 0, 0, h, :]                 # (tk, dh) bf16

        s = jax.lax.dot_general(q, k, (((1,), (1,)), ((), ())),
                                preferred_element_type=jnp.float32) * scale
        if bias is not None:
            s = s + bias

        m_prev = m_sc[h]                         # (tq, 1)
        m_new = jnp.maximum(m_prev, jnp.max(s, axis=-1, keepdims=True))
        alpha = jnp.exp(m_prev - m_new)
        p = jnp.exp(s - m_new)
        l_sc[h] = alpha * l_sc[h] + jnp.sum(p, axis=-1, keepdims=True)
        acc_sc[h] = alpha * acc_sc[h] + jnp.dot(
            p.astype(jnp.bfloat16), v, preferred_element_type=jnp.float32)
        m_sc[h] = m_new

    @pl.when(pl.program_id(2) == pl.num_programs(2) - 1)
    def _():
        for h in range(nhead):
            o_ref[:, 0, h, :] = (acc_sc[h] / l_sc[h]).astype(o_ref.dtype)


def flash_attention(q_arr, k_arr, v_arr, planes, attn_mask, key_padding_mask,
                    nhead, scale):
    """q_arr: (Lq, B, Pq, nh, dh) bf16; k_arr/v_arr: (Lk, B, Pk, nh, dh) bf16.
    `planes` selects which plane of each array holds q/k/v (so a fused QKV
    projection output is consumed in place, no slicing / transposes in HBM).
    attn_mask: (Lq, Lk) additive f32 or None; key_padding_mask: (B, Lk) bool or None."""
    qp, kp, vp = planes
    Lq, B, _, nh, dh = q_arr.shape
    Lk = k_arr.shape[0]

    has_am = attn_mask is not None
    has_kpm = key_padding_mask is not None

    tq = _pick_tile(Lq, (128,))
    tk = _pick_tile(Lk, (128,))

    in_specs = [
        pl.BlockSpec((tq, 1, 1, nh, dh), lambda b, qi, ki: (qi, b, qp, 0, 0)),
        pl.BlockSpec((tk, 1, 1, nh, dh), lambda b, qi, ki: (ki, b, kp, 0, 0)),
        pl.BlockSpec((tk, 1, 1, nh, dh), lambda b, qi, ki: (ki, b, vp, 0, 0)),
    ]
    operands = [q_arr, k_arr, v_arr]
    if has_am:
        in_specs.append(pl.BlockSpec((tq, tk), lambda b, qi, ki: (qi, ki)))
        operands.append(attn_mask.astype(jnp.float32))
    if has_kpm:
        in_specs.append(pl.BlockSpec((1, 1, tk), lambda b, qi, ki: (b, 0, ki)))
        kpm = jnp.where(key_padding_mask, NEG_INF, 0.0).astype(jnp.float32)
        operands.append(kpm.reshape(B, 1, Lk))

    return pl.pallas_call(
        functools.partial(_flash_attn_kernel, scale=scale, nhead=nh,
                          has_am=has_am, has_kpm=has_kpm),
        out_shape=jax.ShapeDtypeStruct((Lq, B, nh, dh), jnp.bfloat16),
        grid=(B, Lq // tq, Lk // tk),
        in_specs=in_specs,
        out_specs=pl.BlockSpec((tq, 1, nh, dh), lambda b, qi, ki: (qi, b, 0, 0)),
        scratch_shapes=[
            pltpu.VMEM((nh, tq, 1), jnp.float32),    # running max (per head)
            pltpu.VMEM((nh, tq, 1), jnp.float32),    # running sum (per head)
            pltpu.VMEM((nh, tq, dh), jnp.float32),   # output accumulator
        ],
        compiler_params=pltpu.CompilerParams(
            dimension_semantics=("parallel", "parallel", "arbitrary"),
            vmem_limit_bytes=VMEM_LIMIT),
    )(*operands)


# ------------------------------- fused FFN -----------------------------------

def _ffn_kernel(x_ref, w1_ref, b1_ref, w2_ref, b2_ref, o_ref):
    h = jnp.dot(x_ref[...], w1_ref[...],
                preferred_element_type=jnp.float32) + b1_ref[...]
    h = jnp.maximum(h, 0.0).astype(jnp.bfloat16)
    o_ref[...] = (jnp.dot(h, w2_ref[...],
                          preferred_element_type=jnp.float32)
                  + b2_ref[...]).astype(o_ref.dtype)


def ffn(x, p):
    L, B, H = x.shape
    FF = p["w1"].shape[1]
    x2 = x.reshape(L * B, H)
    # Fused lin1+ReLU+lin2 (intermediate stays on-chip) only when the
    # DOUBLE-BUFFERED bf16 weight copies stay well inside the v7x-safe budget;
    # otherwise two tiled linear kernels (which pipeline K) are faster than a
    # spilling fused kernel.
    w_bytes = 2 * (H * FF + FF * H) * 2   # 2 buffered copies x bf16
    if w_bytes <= 8 * 1024 * 1024:
        M = x2.shape[0]
        tm = _pick_tile(M, (512, 256, 128))
        out = pl.pallas_call(
            _ffn_kernel,
            out_shape=jax.ShapeDtypeStruct((M, H), jnp.bfloat16),
            grid=(M // tm,),
            in_specs=[
                pl.BlockSpec((tm, H), lambda i: (i, 0)),
                pl.BlockSpec((H, FF), lambda i: (0, 0)),
                pl.BlockSpec((1, FF), lambda i: (0, 0)),
                pl.BlockSpec((FF, H), lambda i: (0, 0)),
                pl.BlockSpec((1, H), lambda i: (0, 0)),
            ],
            out_specs=pl.BlockSpec((tm, H), lambda i: (i, 0)),
            compiler_params=pltpu.CompilerParams(
                dimension_semantics=("parallel",),
                vmem_limit_bytes=VMEM_LIMIT),
        )(x2.astype(jnp.bfloat16), p["w1"], p["b1"].reshape(1, FF),
          p["w2"], p["b2"].reshape(1, H))
    else:
        h = linear(x2, p["w1"], p["b1"], activation="relu")
        out = linear(h, p["w2"], p["b2"])
    return out.reshape(L, B, H)


# --------------------------- Transformer modules -----------------------------

def multi_head_attention(q_in, kv_in, p, attn_mask, key_padding_mask, nhead,
                         is_self_attn):
    """PyTorch nn.MultiheadAttention (batch_first=False) equivalent."""
    Lq, B, E = q_in.shape
    Lk = kv_in.shape[0]
    dh = E // nhead
    scale = 1.0 / math.sqrt(dh)   # folded into the in-kernel QK^T

    if is_self_attn:
        # one fused (E, 3E) projection; planes picked by the flash BlockSpecs
        qkv = linear(q_in.reshape(Lq * B, E), p["w_qkv"], p["b_qkv"])
        qkv = qkv.reshape(Lq, B, 3, nhead, dh)           # free reshape
        attn = flash_attention(qkv, qkv, qkv, (0, 1, 2), attn_mask,
                               key_padding_mask, nhead, scale)
    else:
        q = linear(q_in.reshape(Lq * B, E), p["w_q"], p["b_q"]
                   ).reshape(Lq, B, 1, nhead, dh)
        kv = linear(kv_in.reshape(Lk * B, E), p["w_kv"], p["b_kv"]
                    ).reshape(Lk, B, 2, nhead, dh)
        attn = flash_attention(q, kv, kv, (0, 0, 1), attn_mask,
                               key_padding_mask, nhead, scale)

    # (Lq, B, nh, dh) -> (Lq*B, E) is a free contiguous reshape (no transpose)
    out = linear(attn.reshape(Lq * B, E), p["w_o"], p["b_o"])
    return out.reshape(Lq, B, E)


def encoder_layer(x, p, src_mask, src_kpm, nhead):
    # post-norm (norm_first=False, PyTorch default); dropout = identity (eval)
    a = multi_head_attention(x, x, p["self_attn"], src_mask, src_kpm, nhead, True)
    x = add_layer_norm(x, a, p["norm1_g"], p["norm1_b"])
    f = ffn(x, p)
    x = add_layer_norm(x, f, p["norm2_g"], p["norm2_b"])
    return x


def decoder_layer(x, mem, p, tgt_mask, tgt_kpm, mem_kpm, nhead):
    a = multi_head_attention(x, x, p["self_attn"], tgt_mask, tgt_kpm, nhead, True)
    x = add_layer_norm(x, a, p["norm1_g"], p["norm1_b"])
    a = multi_head_attention(x, mem, p["cross_attn"], None, mem_kpm, nhead, False)
    x = add_layer_norm(x, a, p["norm2_g"], p["norm2_b"])
    f = ffn(x, p)
    x = add_layer_norm(x, f, p["norm3_g"], p["norm3_b"])
    return x


def positional_encoding_table(maxlen, H):
    den = jnp.exp(-jnp.arange(0, H, 2, dtype=jnp.float32) * (math.log(10000.0) / H))
    pos = jnp.arange(0, maxlen, dtype=jnp.float32).reshape(maxlen, 1)
    pe = jnp.zeros((maxlen, H), jnp.float32)
    pe = pe.at[:, 0::2].set(jnp.sin(pos * den))
    pe = pe.at[:, 1::2].set(jnp.cos(pos * den))
    return pe[:, None, :]   # (maxlen, 1, H) — matches pos_embedding.unsqueeze(-2)


def seq2seq_transformer_forward(params, src, trg, src_mask, tgt_mask,
                                src_padding_mask, tgt_padding_mask,
                                memory_key_padding_mask):
    H = params["hidden"]
    nhead = params["nhead"]
    pe = params["pos_embedding"]
    sqrt_h = math.sqrt(H)

    # token embeddings * sqrt(d_model) + positional encoding (dropout = identity)
    src_emb = (jnp.take(params["src_emb"], src, axis=0) * sqrt_h
               + pe[: src.shape[0]]).astype(jnp.bfloat16)
    tgt_emb = (jnp.take(params["tgt_emb"], trg, axis=0) * sqrt_h
               + pe[: trg.shape[0]]).astype(jnp.bfloat16)

    mem = src_emb
    for p in params["enc_layers"]:
        mem = encoder_layer(mem, p, src_mask, src_padding_mask, nhead)
    mem = layer_norm(mem, params["enc_norm_g"], params["enc_norm_b"])

    out = tgt_emb
    for p in params["dec_layers"]:
        out = decoder_layer(out, mem, p, tgt_mask, tgt_padding_mask,
                            memory_key_padding_mask, nhead)
    out = layer_norm(out, params["dec_norm_g"], params["dec_norm_b"])

    T, B, _ = out.shape
    logits = linear(out.reshape(T * B, H), params["gen_w"], params["gen_b"],
                    out_dtype=jnp.float32)
    # generator was padded to a multiple of 128 on the vocab dim -> slice back
    return logits.reshape(T, B, -1)[..., : params["tgt_vocab"]]


# ------------------------------- parameters ----------------------------------

def init_params(key, H, nhead, ffn_dim, n_enc, n_dec, src_vocab, tgt_vocab,
                maxlen=5000):
    keys = iter(jax.random.split(key, 256))

    def nrm(shape, scale=0.02):
        return scale * jax.random.normal(next(keys), shape, jnp.float32)

    def mha():
        # pre-transposed (in_features, out_features) weights, stored bf16 for the MXU
        w = nrm((H, 3 * H))
        b = jnp.zeros((3 * H,), jnp.float32)
        return dict(
            w_qkv=w.astype(jnp.bfloat16), b_qkv=b,
            w_q=w[:, :H].astype(jnp.bfloat16), b_q=b[:H],
            w_kv=w[:, H:].astype(jnp.bfloat16), b_kv=b[H:],
            w_o=nrm((H, H)).astype(jnp.bfloat16),
            b_o=jnp.zeros((H,), jnp.float32))

    def enc_layer():
        return dict(self_attn=mha(),
                    w1=nrm((H, ffn_dim)).astype(jnp.bfloat16),
                    b1=jnp.zeros((ffn_dim,), jnp.float32),
                    w2=nrm((ffn_dim, H)).astype(jnp.bfloat16),
                    b2=jnp.zeros((H,), jnp.float32),
                    norm1_g=jnp.ones((H,), jnp.float32),
                    norm1_b=jnp.zeros((H,), jnp.float32),
                    norm2_g=jnp.ones((H,), jnp.float32),
                    norm2_b=jnp.zeros((H,), jnp.float32))

    def dec_layer():
        d = enc_layer()
        d["cross_attn"] = mha()
        d["norm3_g"] = jnp.ones((H,), jnp.float32)
        d["norm3_b"] = jnp.zeros((H,), jnp.float32)
        return d

    # generator padded to a lane-dense multiple of 128 on the vocab dim
    vt_pad = ((tgt_vocab + 127) // 128) * 128
    gen_w = jnp.zeros((H, vt_pad), jnp.float32).at[:, :tgt_vocab].set(
        nrm((H, tgt_vocab)))

    return dict(
        hidden=H, nhead=nhead, tgt_vocab=tgt_vocab,
        src_emb=nrm((src_vocab, H), 1.0),
        tgt_emb=nrm((tgt_vocab, H), 1.0),
        pos_embedding=positional_encoding_table(maxlen, H),
        enc_layers=[enc_layer() for _ in range(n_enc)],
        dec_layers=[dec_layer() for _ in range(n_dec)],
        enc_norm_g=jnp.ones((H,), jnp.float32), enc_norm_b=jnp.zeros((H,), jnp.float32),
        dec_norm_g=jnp.ones((H,), jnp.float32), dec_norm_b=jnp.zeros((H,), jnp.float32),
        gen_w=gen_w.astype(jnp.bfloat16),
        gen_b=jnp.zeros((vt_pad,), jnp.float32),
    )


# ---------------------------------- main --------------------------------------

if __name__ == "__main__":
    S, T, B = 8, 8, 2          # src len, tgt len, batch
    H, NHEAD, FF = 32, 4, 64   # hidden_size, nhead, dim_feedforward
    VS, VT = 50, 60            # src / tgt vocab sizes
    N_ENC, N_DEC = 2, 2

    key = jax.random.PRNGKey(0)
    k_param, k_src, k_trg = jax.random.split(key, 3)

    params = init_params(k_param, H, NHEAD, FF, N_ENC, N_DEC, VS, VT)

    src = jax.random.randint(k_src, (S, B), 0, VS, dtype=jnp.int32)
    trg = jax.random.randint(k_trg, (T, B), 0, VT, dtype=jnp.int32)

    # The reference passes an all-zeros additive src_mask; None is numerically
    # identical and lets the attention kernel skip the mask DMA entirely.
    src_mask = None
    tgt_mask = jnp.where(jnp.triu(jnp.ones((T, T), bool), k=1),
                         NEG_INF, 0.0).astype(jnp.float32)
    src_padding_mask = jnp.zeros((B, S), bool).at[:, -1].set(True)
    tgt_padding_mask = jnp.zeros((B, T), bool).at[:, -1].set(True)
    memory_key_padding_mask = src_padding_mask

    logits = seq2seq_transformer_forward(
        params, src, trg, src_mask, tgt_mask,
        src_padding_mask, tgt_padding_mask, memory_key_padding_mask)
    logits = jax.block_until_ready(logits)

    assert logits.shape == (T, B, VT), logits.shape
    assert bool(jnp.all(jnp.isfinite(logits)))
    print("KERNEL_OK")
</pallas_src>

<mosaic_0001>
module attributes {stable_mosaic.version = 11 : i64} {
  func.func @_matmul_kernel(%arg0: i32, %arg1: i32, %arg2: i32, %arg3: memref<16x32xbf16, #tpu.memory_space<vmem>>, %arg4: memref<32x96xbf16, #tpu.memory_space<vmem>>, %arg5: memref<1x96xf32, #tpu.memory_space<vmem>>, %arg6: memref<16x96xbf16, #tpu.memory_space<vmem>>, %arg7: memref<16x96xf32, #tpu.memory_space<vmem>>) attributes {dimension_semantics = [#tpu.dimension_semantics<parallel>, #tpu.dimension_semantics<parallel>, #tpu.dimension_semantics<arbitrary>], iteration_bounds = array<i64: 1, 1, 1>, scalar_prefetch = 0 : i64, scratch_operands = 1 : i64, tpu.core_type = #tpu.core_type<tc>, window_params = [{transform_indices = @transform_0, window_bounds = array<i64: 16, 32>}, {transform_indices = @transform_1, window_bounds = array<i64: 32, 96>}, {transform_indices = @transform_2, window_bounds = array<i64: 1, 96>}, {transform_indices = @transform_3, window_bounds = array<i64: 16, 96>}]} {
    %c0_i32 = arith.constant 0 : i32
    %0 = arith.cmpi eq, %arg2, %c0_i32 : i32
    %1 = arith.extui %0 : i1 to i32
    %c0_i32_0 = arith.constant 0 : i32
    %2 = arith.cmpi ne, %1, %c0_i32_0 : i32
    scf.if %2 {
      %cst_10 = arith.constant 0.000000e+00 : f32
      %12 = vector.broadcast %cst_10 : f32 to vector<16x96xf32>
      %c0_11 = arith.constant 0 : index
      %c0_12 = arith.constant 0 : index
      %13 = vector.load %arg7[%c0_11, %c0_12] : memref<16x96xf32, #tpu.memory_space<vmem>>, vector<16x96xf32>
      tpu.vector_store %arg7[%c0_11, %c0_12], %12 {strides = array<i32>} : memref<16x96xf32, #tpu.memory_space<vmem>>, vector<16x96xf32>,
    } else {
    }
    %c0 = arith.constant 0 : index
    %c0_1 = arith.constant 0 : index
    %3 = vector.load %arg7[%c0, %c0_1] : memref<16x96xf32, #tpu.memory_space<vmem>>, vector<16x96xf32>
    %c0_2 = arith.constant 0 : index
    %c0_3 = arith.constant 0 : index
    %4 = vector.load %arg3[%c0_2, %c0_3] : memref<16x32xbf16, #tpu.memory_space<vmem>>, vector<16x32xbf16>
    %c0_4 = arith.constant 0 : index
    %c0_5 = arith.constant 0 : index
    %5 = vector.load %arg4[%c0_4, %c0_5] : memref<32x96xbf16, #tpu.memory_space<vmem>>, vector<32x96xbf16>
    %cst = arith.constant dense<0.000000e+00> : vector<16x96xf32>
    %6 = tpu.matmul %4, %5, %cst {dimension_numbers = #tpu.dot_dimension_numbers<[1], [0], [0], [1], [0, 0, 1, 1], [], []>} : vector<16x32xbf16>, vector<32x96xbf16>, vector<16x96xf32> -> vector<16x96xf32>
    %7 = arith.addf %3, %6 : vector<16x96xf32>
    %c0_6 = arith.constant 0 : index
    %c0_7 = arith.constant 0 : index
    %8 = vector.load %arg7[%c0_6, %c0_7] : memref<16x96xf32, #tpu.memory_space<vmem>>, vector<16x96xf32>
    tpu.vector_store %arg7[%c0_6, %c0_7], %7 {strides = array<i32>} : memref<16x96xf32, #tpu.memory_space<vmem>>, vector<16x96xf32>,
    %c0_i32_8 = arith.constant 0 : i32
    %9 = arith.cmpi eq, %arg2, %c0_i32_8 : i32
    %10 = arith.extui %9 : i1 to i32
    %c0_i32_9 = arith.constant 0 : i32
    %11 = arith.cmpi ne, %10, %c0_i32_9 : i32
    scf.if %11 {
      %c0_10 = arith.constant 0 : index
      %c0_11 = arith.constant 0 : index
      %12 = vector.load %arg7[%c0_10, %c0_11] : memref<16x96xf32, #tpu.memory_space<vmem>>, vector<16x96xf32>
      %c0_12 = arith.constant 0 : index
      %c0_13 = arith.constant 0 : index
      %13 = vector.load %arg5[%c0_12, %c0_13] : memref<1x96xf32, #tpu.memory_space<vmem>>, vector<1x96xf32>
      %14 = vector.broadcast %13 : vector<1x96xf32> to vector<16x96xf32>
      %15 = arith.addf %12, %14 : vector<16x96xf32>
      %16 = arith.truncf %15 : vector<16x96xf32> to vector<16x96xbf16>
      %c0_14 = arith.constant 0 : index
      %c0_15 = arith.constant 0 : index
      %17 = vector.load %arg6[%c0_14, %c0_15] : memref<16x96xbf16, #tpu.memory_space<vmem>>, vector<16x96xbf16>
      tpu.vector_store %arg6[%c0_14, %c0_15], %16 {strides = array<i32>} : memref<16x96xbf16, #tpu.memory_space<vmem>>, vector<16x96xbf16>,
    } else {
    }
    return
  }
  func.func @transform_0(%arg0: i32, %arg1: i32, %arg2: i32) -> (i32, i32) {
    %c0_i32 = arith.constant 0 : i32
    return %arg0, %arg2 : i32, i32
  }
  func.func @transform_1(%arg0: i32, %arg1: i32, %arg2: i32) -> (i32, i32) {
    %c0_i32 = arith.constant 0 : i32
    return %arg2, %arg1 : i32, i32
  }
  func.func @transform_2(%arg0: i32, %arg1: i32, %arg2: i32) -> (i32, i32) {
    %c0_i32 = arith.constant 0 : i32
    %c0_i32_0 = arith.constant 0 : i32
    return %c0_i32, %arg1 : i32, i32
  }
  func.func @transform_3(%arg0: i32, %arg1: i32, %arg2: i32) -> (i32, i32) {
    %c0_i32 = arith.constant 0 : i32
    return %arg0, %arg1 : i32, i32
  }
}

</mosaic_0001>

<llo_original>
// kernel: tpu_custom_call.1
$region0: #{tpu_custom_call.1}
  #allocation0 [shape = 'u32[]', space=smem, size = 0x4, offset = 0x4, fixed_abs, tag = 'smem constant byte address 0x4 - core index']
  #allocation1 [shape = 'u32[144,128]{1,0:T(1,128)}', space=vmem, size = 0x12000, scoped, tag = 'internal scratch']
  #allocation2 [shape = 'f32[16,96]{1,0:T(8,128)}', space=vmem, size = 0x2000, scoped, tag = 'scratch operand']
  %s0 = inlined_call_operand.hbm [shape: bf16[16,32], index: 0, kind: input, shape index: {}]
  %s1 = inlined_call_operand.hbm [shape: bf16[32,96], index: 1, kind: input, shape index: {}]
  %s2 = inlined_call_operand.vmem [shape: f32[1,96], index: 2, kind: input, shape index: {}]
  %s3 = inlined_call_operand.hbm [shape: bf16[16,96], index: 3, kind: output, shape index: {}]
  %s4 = sld [smem:[#allocation0]]
  $region38: #{tpu_custom_call.1} parent=0
    _
  %s6 = ssub.s32 1, %s4
  %s7 = scalar_select 0, %s6, %s4
  $region1: #{tpu_custom_call.1} parent=0
    #allocation3 [shape = 'u8[4096]{0}', space=vmem, size = 0x1000, scoped, tag = 'input window, operand 0, single buffered']
    #allocation4 [shape = 's32[1]{0}', space=sflag, size = 0x4, scoped, tag = 'scoped memory for tpu_custom_call.1']
    #allocation5 [shape = 's32[1]{0}', space=sflag, size = 0x4, scoped, tag = 'scoped memory for tpu_custom_call.1']
    #allocation6 [shape = 'u8[8192]{0}', space=vmem, size = 0x2000, scoped, tag = 'input window, operand 1, single buffered']
    #allocation7 [shape = 's32[1]{0}', space=sflag, size = 0x4, scoped, tag = 'scoped memory for tpu_custom_call.1']
    #allocation8 [shape = 'u8[4096]{0}', space=vmem, size = 0x1000, scoped, tag = 'output window, operand 0, single buffered']
    %8 = vsyncpa [#allocation4], 0
    %9 = vsyncpa [#allocation7], 0
    %10 = vsyncpa [#allocation5], 0
    // Predicated region
    $region2: #{tpu_custom_call.1} parent=1 // pred_check
      _
    $region3: #{tpu_custom_call.1} parent=1 // pred_check_branch
      %12 = sbr.rel (0) target = $region5
    $region4: #{tpu_custom_call.1} parent=1 // pred_region
      %s14 = ssub.s32 128, 128
      %15 = vsyncadd [#allocation4], %s14
      %s16 = sshll.u32 [#allocation3], 4
      %s17 = int_to_ptr.vmem [resolvable:$true] %s16
      %22 = dma.hbm_to_vmem [thread:$0]  %s0, 128, %s17, [#allocation4], 64, 64, 4
    $region5: #{tpu_custom_call.1} parent=1 // pred_fallthru
      _
    // Predicated region
    $region6: #{tpu_custom_call.1} parent=1 // pred_check
      _
    $region7: #{tpu_custom_call.1} parent=1 // pred_check_branch
      %24 = sbr.rel (0) target = $region9
    $region8: #{tpu_custom_call.1} parent=1 // pred_region
      %s26 = ssub.s32 256, 256
      %27 = vsyncadd [#allocation7], %s26
      %s28 = sshll.u32 [#allocation6], 4
      %s29 = int_to_ptr.vmem [resolvable:$true] %s28
      %34 = dma.hbm_to_vmem [thread:$0]  %s1, 256, %s29, [#allocation7], 64, 64, 4
    $region9: #{tpu_custom_call.1} parent=1 // pred_fallthru
      _
    // Predicated region
    $region10: #{tpu_custom_call.1} parent=1 // pred_check
      _
    $region11: #{tpu_custom_call.1} parent=1 // pred_check_branch
      %36 = sbr.rel (0) target = $region13
    $region12: #{tpu_custom_call.1} parent=1 // pred_region
      _
    $region13: #{tpu_custom_call.1} parent=1 // pred_fallthru
      _
    // Predicated region
    $region14: #{tpu_custom_call.1} parent=1 // pred_check
      _
    $region15: #{tpu_custom_call.1} parent=1 // pred_check_branch
      %38 = sbr.rel (0) target = $region17
    $region16: #{tpu_custom_call.1} parent=1 // pred_region
      %39 = dma.done [#allocation4], 128
    $region17: #{tpu_custom_call.1} parent=1 // pred_fallthru
      _
    // Predicated region
    $region18: #{tpu_custom_call.1} parent=1 // pred_check
      _
    $region19: #{tpu_custom_call.1} parent=1 // pred_check_branch
      %41 = sbr.rel (0) target = $region21
    $region20: #{tpu_custom_call.1} parent=1 // pred_region
      %42 = dma.done [#allocation7], 256
    $region21: #{tpu_custom_call.1} parent=1 // pred_fallthru
      _
    %p44 = scmp.eq.s32.totalorder 0, 0
    // Predicated region
    $region22: #{tpu_custom_call.1} parent=1 // pred_check
      %p45 = pneg %p44
    $region23: #{tpu_custom_call.1} parent=1 // pred_check_branch
      %47 = sbr.rel (%p45) target = $region25
    $region24: #{tpu_custom_call.1} parent=1 // pred_region
      %vm48 = vcmask 785408
      %49 = vst.msk [vmem:[#allocation2] sm:$0xff] %vm48, 0.0
      %50 = vst.msk [vmem:[#allocation2 + $0x8] sm:$0xff] %vm48, 0.0
    $region25: #{tpu_custom_call.1} parent=1 // pred_fallthru
      _
    %v51 = vld [vmem:[#allocation2] sm:$0xff]
    %v52 = vld [vmem:[#allocation2 + $0x8] sm:$0xff]
    %v53 = vld [vmem:[#allocation3] sm:$0xf]
    %v54 = vld [vmem:[#allocation3 + $0x4] sm:$0xf]
    %v55 = vld [vmem:[#allocation6] sm:$0xf]
    %v56 = vld [vmem:[#allocation6 + $0x4] sm:$0xf]
    %v57 = vld [vmem:[#allocation6 + $0x8] sm:$0xf]
    %v58 = vld [vmem:[#allocation6 + $0xc] sm:$0xf]
    %v61 = vunpack.c.l.b16 %v53
    %v62 = vunpack.c.l.b16 %v54
    %v63 = vpack.c.b16 %v62, %v61
    %v68 = vunpack.c.l.b16 %v55
    %v69 = vunpack.c.l.b16 %v56
    %v70 = vunpack.c.l.b16 %v57
    %v71 = vunpack.c.l.b16 %v58
    %v72 = vpack.c.b16 %v69, %v68
    %v73 = vpack.c.b16 %v71, %v70
    %vm76 = vcmask 261120
    %v78 = vsel %vm76, %v63, 0
    %80 = vmatprep.subr.bf16.mxu0 0
    %81 = vmatpush1.bf16.msra.mxu0 0
    %82 = vmatprep.subr.bf16.mxu0 0
    %83 = vmatpush1.bf16.msra.mxu0 0
    %84 = vmatprep.subr.bf16.mxu0 0
    %85 = vmatpush1.bf16.msra.mxu0 0
    %86 = vmatprep.subr.bf16.mxu0 0
    %87 = vmatpush1.bf16.msra.mxu0 0
    %88 = vmatprep.subr.bf16.mxu0 0
    %89 = vmatpush1.bf16.msra.mxu0 0
    %90 = vmatprep.subr.bf16.mxu0 0
    %91 = vmatpush1.bf16.msra.mxu0 0
    %92 = vmatprep.subr.bf16.mxu0 0
    %93 = vmatpush1.bf16.msra.mxu0 %v73
    %94 = vmatprep.subr.bf16.mxu0 0
    %95 = vmatpush1.bf16.msra.mxu0 %v72
    %96 = vmatprep.subr.bf16.mxu0 0
    %97 = vmatpush2.bf16.msra.mxu0 0
    %98 = vmatprep.subr.bf16.mxu0 0
    %99 = vmatpush2.bf16.msra.mxu0 0
    %100 = vmatprep.subr.bf16.mxu0 0
    %101 = vmatpush2.bf16.msra.mxu0 0
    %102 = vmatprep.subr.bf16.mxu0 0
    %103 = vmatpush2.bf16.msra.mxu0 0
    %104 = vmatprep.subr.bf16.mxu0 0
    %105 = vmatpush2.bf16.msra.mxu0 0
    %106 = vmatprep.subr.bf16.mxu0 0
    %107 = vmatpush2.bf16.msra.mxu0 0
    %108 = vmatprep.subr.bf16.mxu0 0
    %109 = vmatpush2.bf16.msra.mxu0 0
    %110 = vmatprep.subr.bf16.mxu0 0
    %111 = vmatpush2.bf16.msra.mxu0 0
    %112 = vmatprep.mubr.bf16.mxu0 0
    %113 = vmatmul.mubr.bf16.gmra.mxu0 %v78
    %v114 = vpop.f32.mrf.mxu0
    %v115 = vadd.f32 0.0, %v114
    %v116 = vpop.f32.mrf.mxu0
    %v117 = vpop.f32.mrf.mxu0
    %v118 = vadd.f32 0.0, %v117
    %v119 = vpop.f32.mrf.mxu0
    %120 = vdwg.mxu0
    %v121 = vadd.f32 %v51, %v115
    %v122 = vadd.f32 %v52, %v118
    %vm123 = vcmask 785408
    %124 = vst.msk [vmem:[#allocation2] sm:$0xff] %vm123, %v121
    %125 = vst.msk [vmem:[#allocation2 + $0x8] sm:$0xff] %vm123, %v122
    // Predicated region
    $region26: #{tpu_custom_call.1} parent=1 // pred_check
      %p126 = pneg %p44
    $region27: #{tpu_custom_call.1} parent=1 // pred_check_branch
      %128 = sbr.rel (%p126) target = $region29
    $region28: #{tpu_custom_call.1} parent=1 // pred_region
      %v129 = vld [vmem:[#allocation2] sm:$0xff]
      %v130 = vld [vmem:[#allocation2 + $0x8] sm:$0xff]
      %v131 = vld [vmem:[%s2] sm:$0x1]
      %v133 = vlaneseq
      %v134 = vshrl.u32 %v133, 7
      %v135 = vsub.s32 0, %v134
      %v136 = vrot.slane %v131, %v135
      %v138 = vadd.f32 %v129, %v136
      %v139 = vadd.f32 %v130, %v136
      %v140 = vpack.c.bf16 %v139, %v138
      %v142 = vunpack.c.l.b16 %v140
      %v143 = vunpack.c.h.b16 %v140
      %v144 = vpack.c.b16 %v142, %v142
      %v145 = vpack.c.b16 %v143, %v143
      %vm148 = vcmask 781312
      %149 = vst.msk [vmem:[#allocation8] sm:$0xf] %vm148, %v144
      %150 = vst.msk [vmem:[#allocation8 + $0x4] sm:$0xf] %vm148, %v145
    $region29: #{tpu_custom_call.1} parent=1 // pred_fallthru
      _
    // Predicated region
    $region30: #{tpu_custom_call.1} parent=1 // pred_check
      _
    $region31: #{tpu_custom_call.1} parent=1 // pred_check_branch
      %152 = sbr.rel (0) target = $region33
    $region32: #{tpu_custom_call.1} parent=1 // pred_region
      %s154 = ssub.s32 128, 128
      %155 = vsyncadd [#allocation5], %s154
      %s156 = sshll.u32 [#allocation8], 4
      %s157 = int_to_ptr.vmem [resolvable:$true] %s156
      %162 = dma.vmem_to_hbm [thread:$0]  %s157, 128, %s3, [#allocation5], 64, 64, 4
    $region33: #{tpu_custom_call.1} parent=1 // pred_fallthru
      _
    // Predicated region
    $region34: #{tpu_custom_call.1} parent=1 // pred_check
      _
    $region35: #{tpu_custom_call.1} parent=1 // pred_check_branch
      %164 = sbr.rel (0) target = $region37
    $region36: #{tpu_custom_call.1} parent=1 // pred_region
      %165 = dma.done [#allocation5], 128
    $region37: #{tpu_custom_call.1} parent=1 // pred_fallthru
      _
    %166 = vsyncpa [#allocation4], 1
    %167 = vsyncpa [#allocation7], 1
    %168 = vsyncpa [#allocation5], 1

</llo_original>
